<compile_context>
chip_gen: v7x
topology: tpu7x:2x2x1
jax: 0.10.0
libtpu: 0.0.40
codegen_flags: <defaults>
</compile_context>

<pallas_src>
import functools

import jax
import jax.numpy as jnp
from jax.experimental import pallas as pl
from jax.experimental.pallas import tpu as pltpu


# ---------------------------------------------------------------------------
# Kernels
# ---------------------------------------------------------------------------

def _layernorm_f32(z, gamma_f32, beta_f32, eps):
    """Two-pass LayerNorm over the last axis, all math in f32."""
    inv_h = 1.0 / z.shape[-1]
    mean = jnp.sum(z, axis=-1, keepdims=True) * inv_h
    d = z - mean
    var = jnp.sum(d * d, axis=-1, keepdims=True) * inv_h
    return d * jax.lax.rsqrt(var + eps) * gamma_f32 + beta_f32


def _addnorm_eval_kernel(x_ref, y_ref, g_ref, b_ref, o_ref, *, eps):
    z = x_ref[...].astype(jnp.float32) + y_ref[...].astype(jnp.float32)
    o_ref[...] = _layernorm_f32(z, g_ref[...], b_ref[...], eps).astype(o_ref.dtype)


def _addnorm_train_kernel(x_ref, y_ref, m_ref, g_ref, b_ref, o_ref, *,
                          eps, inv_keep):
    # Mask in the native I/O dtype (bf16-friendly on v6e/v7x VPUs), then upcast
    # and apply the exact 1/keep_prob scale in f32.
    y = (y_ref[...] * m_ref[...]).astype(jnp.float32) * inv_keep
    z = x_ref[...].astype(jnp.float32) + y
    o_ref[...] = _layernorm_f32(z, g_ref[...], b_ref[...], eps).astype(o_ref.dtype)


# ---------------------------------------------------------------------------
# Tiling / VMEM helpers
# ---------------------------------------------------------------------------

def _vmem_limit_bytes():
    """Generation-aware VMEM request: capacity minus ~16 MiB headroom."""
    cap = 128 << 20
    try:
        info = pltpu.get_tpu_info()
        cap = int(getattr(info, "vmem_capacity_bytes", cap)) or cap
    except Exception:
        pass
    # v5e/v6e (128 MiB) -> 112 MiB; v7x (64 MiB per TC) -> 48 MiB.
    return int(min(max(cap - (16 << 20), 32 << 20), 112 << 20))


def _choose_block_rows(rows, hidden, io_itemsize, mask_itemsize, vmem_limit):
    """Largest row tile whose VMEM footprint fits the budget.

    Per-row footprint: double-buffered x/y/out (+ mask in train) tiles in the
    I/O dtype, plus ~3 full-tile f32 temporaries (z, z-mean, normalized out).
    """
    rows_padded = -(-rows // 8) * 8
    per_row = hidden * (2 * (3 * io_itemsize + mask_itemsize) + 3 * 4)
    budget = max(vmem_limit - (8 << 20), 4 << 20)     # headroom for params/scratch
    br = budget // max(per_row, 1)
    br = max(8, (br // 8) * 8)
    br = min(br, rows_padded)
    return max(8, br)


# ---------------------------------------------------------------------------
# Wrapper
# ---------------------------------------------------------------------------

def add_norm(x, y, gamma, beta, *, dropout_p=0.0, train=False, rng_key=None,
             eps=1e-5, block_rows=None):
    """LayerNorm(dropout(Y) + X) over the last axis (PyTorch AddNorm forward)."""
    assert x.shape == y.shape
    hidden = x.shape[-1]
    rows = x.size // hidden
    itemsize = x.dtype.itemsize
    use_dropout = bool(train) and float(dropout_p) > 0.0

    vmem_limit = _vmem_limit_bytes()
    if block_rows is None:
        block_rows = _choose_block_rows(
            rows, hidden, itemsize, itemsize if use_dropout else 0, vmem_limit)

    x2 = x.reshape(rows, hidden)
    y2 = y.reshape(rows, hidden)
    # Cast params to f32 once here (hoisted out of the per-tile body).
    g2 = gamma.reshape(1, hidden).astype(jnp.float32)
    b2 = beta.reshape(1, hidden).astype(jnp.float32)

    grid = (-(-rows // block_rows),)   # cdiv; ragged row tail handled by Pallas

    compiler_params = pltpu.CompilerParams(
        dimension_semantics=("parallel",),
        vmem_limit_bytes=vmem_limit,
    )
    out_shape = jax.ShapeDtypeStruct((rows, hidden), x.dtype)

    n_io = 4 if use_dropout else 3
    cost = pl.CostEstimate(
        flops=10 * rows * hidden,
        transcendentals=rows,
        bytes_accessed=n_io * rows * hidden * itemsize + 2 * hidden * 4,
    )

    if use_dropout:
        keep_prob = 1.0 - float(dropout_p)
        if rng_key is None:
            rng_key = jax.random.PRNGKey(0)
        # Keep-mask in the I/O dtype (exact 0/1 values), streamed like y.
        mask2 = jax.random.bernoulli(rng_key, keep_prob, (rows, hidden)).astype(y.dtype)
        out2 = pl.pallas_call(
            functools.partial(_addnorm_train_kernel, eps=eps,
                              inv_keep=1.0 / keep_prob),
            out_shape=out_shape,
            grid_spec=pltpu.PrefetchScalarGridSpec(
                num_scalar_prefetch=0,
                grid=grid,
                in_specs=[
                    pl.BlockSpec((block_rows, hidden), lambda i: (i, 0)),
                    pl.BlockSpec((block_rows, hidden), lambda i: (i, 0)),
                    pl.BlockSpec((block_rows, hidden), lambda i: (i, 0)),
                    pl.BlockSpec((1, hidden), lambda i: (0, 0)),
                    pl.BlockSpec((1, hidden), lambda i: (0, 0)),
                ],
                out_specs=pl.BlockSpec((block_rows, hidden), lambda i: (i, 0)),
            ),
            compiler_params=compiler_params,
            cost_estimate=cost,
        )(x2, y2, mask2, g2, b2)
    else:
        # Inference / p==0 path: no mask input, no dropout code at all.
        out2 = pl.pallas_call(
            functools.partial(_addnorm_eval_kernel, eps=eps),
            out_shape=out_shape,
            grid_spec=pltpu.PrefetchScalarGridSpec(
                num_scalar_prefetch=0,
                grid=grid,
                in_specs=[
                    pl.BlockSpec((block_rows, hidden), lambda i: (i, 0)),
                    pl.BlockSpec((block_rows, hidden), lambda i: (i, 0)),
                    pl.BlockSpec((1, hidden), lambda i: (0, 0)),
                    pl.BlockSpec((1, hidden), lambda i: (0, 0)),
                ],
                out_specs=pl.BlockSpec((block_rows, hidden), lambda i: (i, 0)),
            ),
            compiler_params=compiler_params,
            cost_estimate=cost,
        )(x2, y2, g2, b2)

    return out2.reshape(x.shape)


# ---------------------------------------------------------------------------
# Reference + demo
# ---------------------------------------------------------------------------

def _reference(x, y, gamma, beta, eps=1e-5):
    z = y.astype(jnp.float32) + x.astype(jnp.float32)
    mean = jnp.mean(z, axis=-1, keepdims=True)
    var = jnp.mean((z - mean) ** 2, axis=-1, keepdims=True)
    out = (z - mean) * jax.lax.rsqrt(var + eps) * gamma.astype(jnp.float32) \
        + beta.astype(jnp.float32)
    return out.astype(x.dtype)


if __name__ == "__main__":
    key = jax.random.PRNGKey(0)

    # --- Small shape implied by the module (eval mode: dropout is identity) ---
    batch, seq, hidden = 2, 8, 32
    dropout_p = 0.1

    k0, k1, k2, k3 = jax.random.split(key, 4)
    x = jax.random.normal(k0, (batch, seq, hidden), dtype=jnp.float32)
    y = jax.random.normal(k1, (batch, seq, hidden), dtype=jnp.float32)
    gamma = jnp.ones((hidden,), dtype=jnp.float32)   # nn.LayerNorm default init
    beta = jnp.zeros((hidden,), dtype=jnp.float32)

    out = jax.block_until_ready(
        add_norm(x, y, gamma, beta, dropout_p=dropout_p, train=False))
    ref = _reference(x, y, gamma, beta)
    assert out.shape == x.shape and out.dtype == x.dtype
    assert jnp.max(jnp.abs(out - ref)) < 1e-4

    # --- Lane-dense bf16 path (hidden multiple of 128) ---
    h2 = 128
    xb = jax.random.normal(k2, (2, 64, h2), dtype=jnp.float32).astype(jnp.bfloat16)
    yb = jax.random.normal(k3, (2, 64, h2), dtype=jnp.float32).astype(jnp.bfloat16)
    gb = jnp.ones((h2,), dtype=jnp.bfloat16)
    bb = jnp.zeros((h2,), dtype=jnp.bfloat16)
    outb = jax.block_until_ready(add_norm(xb, yb, gb, bb, train=False))
    refb = _reference(xb, yb, gb, bb)
    assert outb.shape == xb.shape and outb.dtype == jnp.bfloat16
    assert jnp.max(jnp.abs(outb.astype(jnp.float32) - refb.astype(jnp.float32))) < 5e-2

    # --- Train-mode test (dropout active; mask reproduced outside the kernel) ---
    p_tr = 0.5
    tr_key = jax.random.PRNGKey(123)
    out_tr = jax.block_until_ready(
        add_norm(x, y, gamma, beta, dropout_p=p_tr, train=True, rng_key=tr_key))
    keep = jax.random.bernoulli(tr_key, 1.0 - p_tr,
                                (batch * seq, hidden)).reshape(batch, seq, hidden)
    y_drop = jnp.where(keep, y / (1.0 - p_tr), 0.0)
    ref_tr = _reference(x, y_drop, gamma, beta)
    assert out_tr.shape == x.shape and out_tr.dtype == x.dtype
    assert bool(jnp.all(jnp.isfinite(out_tr)))
    assert jnp.max(jnp.abs(out_tr - ref_tr)) < 1e-4

    print("KERNEL_OK")
</pallas_src>

<mosaic_0001>
module attributes {stable_mosaic.version = 11 : i64} {
  func.func @_addnorm_eval_kernel(%arg0: i32, %arg1: memref<16x32xf32, #tpu.memory_space<vmem>>, %arg2: memref<16x32xf32, #tpu.memory_space<vmem>>, %arg3: memref<1x32xf32, #tpu.memory_space<vmem>>, %arg4: memref<1x32xf32, #tpu.memory_space<vmem>>, %arg5: memref<16x32xf32, #tpu.memory_space<vmem>>) attributes {dimension_semantics = [#tpu.dimension_semantics<parallel>], iteration_bounds = array<i64: 1>, scalar_prefetch = 0 : i64, scratch_operands = 0 : i64, tpu.core_type = #tpu.core_type<tc>, window_params = [{transform_indices = @transform_0, window_bounds = array<i64: 16, 32>}, {transform_indices = @transform_1, window_bounds = array<i64: 16, 32>}, {pipeline_mode = #tpu.pipeline_mode<synchronous>, transform_indices = @transform_2, window_bounds = array<i64: 1, 32>}, {pipeline_mode = #tpu.pipeline_mode<synchronous>, transform_indices = @transform_3, window_bounds = array<i64: 1, 32>}, {transform_indices = @transform_4, window_bounds = array<i64: 16, 32>}]} {
    %c0 = arith.constant 0 : index
    %c0_0 = arith.constant 0 : index
    %0 = vector.load %arg1[%c0, %c0_0] : memref<16x32xf32, #tpu.memory_space<vmem>>, vector<16x32xf32>
    %c0_1 = arith.constant 0 : index
    %c0_2 = arith.constant 0 : index
    %1 = vector.load %arg2[%c0_1, %c0_2] : memref<16x32xf32, #tpu.memory_space<vmem>>, vector<16x32xf32>
    %2 = arith.addf %0, %1 : vector<16x32xf32>
    %c0_3 = arith.constant 0 : index
    %c0_4 = arith.constant 0 : index
    %3 = vector.load %arg3[%c0_3, %c0_4] : memref<1x32xf32, #tpu.memory_space<vmem>>, vector<1x32xf32>
    %c0_5 = arith.constant 0 : index
    %c0_6 = arith.constant 0 : index
    %4 = vector.load %arg4[%c0_5, %c0_6] : memref<1x32xf32, #tpu.memory_space<vmem>>, vector<1x32xf32>
    %cst = arith.constant dense<0.000000e+00> : vector<16xf32>
    %5 = vector.multi_reduction <add>, %2, %cst [1] : vector<16x32xf32> to vector<16xf32>
    %6 = vector.shape_cast %5 : vector<16xf32> to vector<16x1xf32>
    %cst_7 = arith.constant 3.125000e-02 : f32
    %7 = vector.broadcast %cst_7 : f32 to vector<16x1xf32>
    %8 = arith.mulf %6, %7 : vector<16x1xf32>
    %9 = vector.broadcast %8 : vector<16x1xf32> to vector<16x32xf32>
    %10 = arith.subf %2, %9 : vector<16x32xf32>
    %11 = arith.mulf %10, %10 : vector<16x32xf32>
    %cst_8 = arith.constant dense<0.000000e+00> : vector<16xf32>
    %12 = vector.multi_reduction <add>, %11, %cst_8 [1] : vector<16x32xf32> to vector<16xf32>
    %13 = vector.shape_cast %12 : vector<16xf32> to vector<16x1xf32>
    %cst_9 = arith.constant 3.125000e-02 : f32
    %14 = vector.broadcast %cst_9 : f32 to vector<16x1xf32>
    %15 = arith.mulf %13, %14 : vector<16x1xf32>
    %cst_10 = arith.constant 9.99999974E-6 : f32
    %16 = vector.broadcast %cst_10 : f32 to vector<16x1xf32>
    %17 = arith.addf %15, %16 : vector<16x1xf32>
    %18 = math.rsqrt %17 : vector<16x1xf32>
    %19 = vector.broadcast %18 : vector<16x1xf32> to vector<16x32xf32>
    %20 = arith.mulf %10, %19 : vector<16x32xf32>
    %21 = vector.broadcast %3 : vector<1x32xf32> to vector<16x32xf32>
    %22 = arith.mulf %20, %21 : vector<16x32xf32>
    %23 = vector.broadcast %4 : vector<1x32xf32> to vector<16x32xf32>
    %24 = arith.addf %22, %23 : vector<16x32xf32>
    %c0_11 = arith.constant 0 : index
    %c0_12 = arith.constant 0 : index
    %25 = vector.load %arg5[%c0_11, %c0_12] : memref<16x32xf32, #tpu.memory_space<vmem>>, vector<16x32xf32>
    tpu.vector_store %arg5[%c0_11, %c0_12], %24 {strides = array<i32>} : memref<16x32xf32, #tpu.memory_space<vmem>>, vector<16x32xf32>,
    return
  }
  func.func @transform_0(%arg0: i32) -> (i32, i32) {
    %c0_i32 = arith.constant 0 : i32
    %c0_i32_0 = arith.constant 0 : i32
    return %arg0, %c0_i32 : i32, i32
  }
  func.func @transform_1(%arg0: i32) -> (i32, i32) {
    %c0_i32 = arith.constant 0 : i32
    %c0_i32_0 = arith.constant 0 : i32
    return %arg0, %c0_i32 : i32, i32
  }
  func.func @transform_2(%arg0: i32) -> (i32, i32) {
    %c0_i32 = arith.constant 0 : i32
    %c0_i32_0 = arith.constant 0 : i32
    %c0_i32_1 = arith.constant 0 : i32
    return %c0_i32, %c0_i32_0 : i32, i32
  }
  func.func @transform_3(%arg0: i32) -> (i32, i32) {
    %c0_i32 = arith.constant 0 : i32
    %c0_i32_0 = arith.constant 0 : i32
    %c0_i32_1 = arith.constant 0 : i32
    return %c0_i32, %c0_i32_0 : i32, i32
  }
  func.func @transform_4(%arg0: i32) -> (i32, i32) {
    %c0_i32 = arith.constant 0 : i32
    %c0_i32_0 = arith.constant 0 : i32
    return %arg0, %c0_i32 : i32, i32
  }
}

</mosaic_0001>

<llo_original>
// kernel: tpu_custom_call.1
$region0: #{tpu_custom_call.1}
  #allocation0 [shape = 'u32[]', space=smem, size = 0x4, offset = 0x4, fixed_abs, tag = 'smem constant byte address 0x4 - core index']
  #allocation1 [shape = 'u32[144,128]{1,0:T(1,128)}', space=vmem, size = 0x12000, scoped, tag = 'internal scratch']
  %s0 = inlined_call_operand.hbm [shape: f32[16,32], index: 0, kind: input, shape index: {}]
  %s1 = inlined_call_operand.hbm [shape: f32[16,32], index: 1, kind: input, shape index: {}]
  %s2 = inlined_call_operand.hbm [shape: f32[1,32], index: 2, kind: input, shape index: {}]
  %s3 = inlined_call_operand.hbm [shape: f32[1,32], index: 3, kind: input, shape index: {}]
  %s4 = inlined_call_operand.hbm [shape: f32[16,32], index: 4, kind: output, shape index: {}]
  %s5 = sld [smem:[#allocation0]]
  $region42: #{tpu_custom_call.1} parent=0
    _
  %s7 = ssub.s32 1, %s5
  %s8 = scalar_select 0, %s7, %s5
  $region1: #{tpu_custom_call.1} parent=0
    #allocation2 [shape = 'u8[8192]{0}', space=vmem, size = 0x2000, scoped, tag = 'input window, operand 0, single buffered']
    #allocation3 [shape = 's32[1]{0}', space=sflag, size = 0x4, scoped, tag = 'scoped memory for tpu_custom_call.1']
    #allocation4 [shape = 's32[1]{0}', space=sflag, size = 0x4, scoped, tag = 'scoped memory for tpu_custom_call.1']
    #allocation5 [shape = 'u8[8192]{0}', space=vmem, size = 0x2000, scoped, tag = 'input window, operand 1, single buffered']
    #allocation6 [shape = 's32[1]{0}', space=sflag, size = 0x4, scoped, tag = 'scoped memory for tpu_custom_call.1']
    #allocation7 [shape = 'u8[512]{0}', space=vmem, size = 0x400, scoped, tag = 'input window, operand 2, single buffered']
    #allocation8 [shape = 'u8[512]{0}', space=vmem, size = 0x400, scoped, tag = 'input window, operand 3, single buffered']
    #allocation9 [shape = 's32[1]{0}', space=sflag, size = 0x4, scoped, tag = 'scoped memory for tpu_custom_call.1']
    #allocation10 [shape = 'u8[8192]{0}', space=vmem, size = 0x2000, scoped, tag = 'output window, operand 0, single buffered']
    %9 = vsyncpa [#allocation3], 0
    %10 = vsyncpa [#allocation6], 0
    %11 = vsyncpa [#allocation9], 0
    %12 = vsyncpa [#allocation4], 0
    // Predicated region
    $region2: #{tpu_custom_call.1} parent=1 // pred_check
      _
    $region3: #{tpu_custom_call.1} parent=1 // pred_check_branch
      %14 = sbr.rel (0) target = $region5
    $region4: #{tpu_custom_call.1} parent=1 // pred_region
      %s16 = ssub.s32 256, 256
      %17 = vsyncadd [#allocation3], %s16
      %s18 = sshll.u32 [#allocation2], 4
      %s19 = int_to_ptr.vmem [resolvable:$true] %s18
      %24 = dma.hbm_to_vmem [thread:$0]  %s0, 256, %s19, [#allocation3], 128, 128, 8
    $region5: #{tpu_custom_call.1} parent=1 // pred_fallthru
      _
    // Predicated region
    $region6: #{tpu_custom_call.1} parent=1 // pred_check
      _
    $region7: #{tpu_custom_call.1} parent=1 // pred_check_branch
      %26 = sbr.rel (0) target = $region9
    $region8: #{tpu_custom_call.1} parent=1 // pred_region
      %s28 = ssub.s32 256, 256
      %29 = vsyncadd [#allocation6], %s28
      %s30 = sshll.u32 [#allocation5], 4
      %s31 = int_to_ptr.vmem [resolvable:$true] %s30
      %36 = dma.hbm_to_vmem [thread:$0]  %s1, 256, %s31, [#allocation6], 128, 128, 8
    $region9: #{tpu_custom_call.1} parent=1 // pred_fallthru
      _
    // Predicated region
    $region10: #{tpu_custom_call.1} parent=1 // pred_check
      _
    $region11: #{tpu_custom_call.1} parent=1 // pred_check_branch
      %38 = sbr.rel (0) target = $region13
    $region12: #{tpu_custom_call.1} parent=1 // pred_region
      %s40 = ssub.s32 16, 16
      %41 = vsyncadd [#allocation6], %s40
      %s43 = sshll.u32 [#allocation7], 4
      %s44 = int_to_ptr.vmem [resolvable:$true] %s43
      %46 = dma.hbm_to_vmem [thread:$0]  %s2, 16, %s44, [#allocation6]
    $region13: #{tpu_custom_call.1} parent=1 // pred_fallthru
      _
    // Predicated region
    $region14: #{tpu_custom_call.1} parent=1 // pred_check
      _
    $region15: #{tpu_custom_call.1} parent=1 // pred_check_branch
      %48 = sbr.rel (0) target = $region17
    $region16: #{tpu_custom_call.1} parent=1 // pred_region
      %s50 = ssub.s32 16, 16
      %51 = vsyncadd [#allocation9], %s50
      %s53 = sshll.u32 [#allocation8], 4
      %s54 = int_to_ptr.vmem [resolvable:$true] %s53
      %56 = dma.hbm_to_vmem [thread:$0]  %s3, 16, %s54, [#allocation9]
    $region17: #{tpu_custom_call.1} parent=1 // pred_fallthru
      _
    // Predicated region
    $region18: #{tpu_custom_call.1} parent=1 // pred_check
      _
    $region19: #{tpu_custom_call.1} parent=1 // pred_check_branch
      %58 = sbr.rel (0) target = $region21
    $region20: #{tpu_custom_call.1} parent=1 // pred_region
      %59 = dma.done [#allocation3], 256
    $region21: #{tpu_custom_call.1} parent=1 // pred_fallthru
      _
    // Predicated region
    $region22: #{tpu_custom_call.1} parent=1 // pred_check
      _
    $region23: #{tpu_custom_call.1} parent=1 // pred_check_branch
      %61 = sbr.rel (0) target = $region25
    $region24: #{tpu_custom_call.1} parent=1 // pred_region
      %62 = dma.done [#allocation6], 256
    $region25: #{tpu_custom_call.1} parent=1 // pred_fallthru
      _
    // Predicated region
    $region26: #{tpu_custom_call.1} parent=1 // pred_check
      _
    $region27: #{tpu_custom_call.1} parent=1 // pred_check_branch
      %64 = sbr.rel (0) target = $region29
    $region28: #{tpu_custom_call.1} parent=1 // pred_region
      %65 = dma.done [#allocation6], 16
    $region29: #{tpu_custom_call.1} parent=1 // pred_fallthru
      _
    // Predicated region
    $region30: #{tpu_custom_call.1} parent=1 // pred_check
      _
    $region31: #{tpu_custom_call.1} parent=1 // pred_check_branch
      %67 = sbr.rel (0) target = $region33
    $region32: #{tpu_custom_call.1} parent=1 // pred_region
      %68 = dma.done [#allocation9], 16
    $region33: #{tpu_custom_call.1} parent=1 // pred_fallthru
      _
    %v69 = vld [vmem:[#allocation2] sm:$0xff]
    %v70 = vld [vmem:[#allocation2 + $0x8] sm:$0xff]
    %v71 = vld [vmem:[#allocation5] sm:$0xff]
    %v72 = vld [vmem:[#allocation5 + $0x8] sm:$0xff]
    %v73 = vadd.f32 %v69, %v71
    %v74 = vadd.f32 %v70, %v72
    %v75 = vld [vmem:[#allocation7] sm:$0x1]
    %v76 = vld [vmem:[#allocation8] sm:$0x1]
    %vm77 = vcmask 261120
    %v78 = vsel %vm77, %v73, 0.0
    %79 = vadd.xlane.f32.xlu0 %v78
    %v80 = vpop.xlane.xlu0 %79
    %v81 = vsel %vm77, %v74, 0.0
    %82 = vadd.xlane.f32.xlu0 %v81
    %v83 = vpop.xlane.xlu0 %82
    %v84 = vmul.f32 %v80, 0.03125
    %v85 = vmul.f32 %v83, 0.03125
    %v86 = vsub.f32 %v73, %v84
    %v87 = vsub.f32 %v74, %v85
    %v88 = vmul.f32 %v86, %v86
    %v89 = vmul.f32 %v87, %v87
    %v90 = vsel %vm77, %v88, 0.0
    %91 = vadd.xlane.f32.xlu0 %v90
    %v92 = vpop.xlane.xlu0 %91
    %v93 = vsel %vm77, %v89, 0.0
    %94 = vadd.xlane.f32.xlu0 %v93
    %v95 = vpop.xlane.xlu0 %94
    %v96 = vmul.f32 %v92, 0.03125
    %v97 = vmul.f32 %v95, 0.03125
    %v98 = vadd.f32 %v96, 1e-05
    %v99 = vadd.f32 %v97, 1e-05
    %v100 = vrsqrt.pop %v98
    %v101 = vrsqrt.pop %v99
    %v102 = vmul.f32 %v86, %v100
    %v103 = vmul.f32 %v87, %v101
    %v105 = vlaneseq
    %v106 = vshrl.u32 %v105, 7
    %v107 = vsub.s32 0, %v106
    %v108 = vrot.slane %v75, %v107
    %v110 = vmul.f32 %v102, %v108
    %v111 = vmul.f32 %v103, %v108
    %v113 = vlaneseq
    %v114 = vshrl.u32 %v113, 7
    %v115 = vsub.s32 0, %v114
    %v116 = vrot.slane %v76, %v115
    %v118 = vadd.f32 %v110, %v116
    %v119 = vadd.f32 %v111, %v116
    %120 = vst.msk [vmem:[#allocation10] sm:$0xff] %vm77, %v118
    %121 = vst.msk [vmem:[#allocation10 + $0x8] sm:$0xff] %vm77, %v119
    // Predicated region
    $region34: #{tpu_custom_call.1} parent=1 // pred_check
      _
    $region35: #{tpu_custom_call.1} parent=1 // pred_check_branch
      %123 = sbr.rel (0) target = $region37
    $region36: #{tpu_custom_call.1} parent=1 // pred_region
      %s125 = ssub.s32 256, 256
      %126 = vsyncadd [#allocation4], %s125
      %s127 = sshll.u32 [#allocation10], 4
      %s128 = int_to_ptr.vmem [resolvable:$true] %s127
      %133 = dma.vmem_to_hbm [thread:$0]  %s128, 256, %s4, [#allocation4], 128, 128, 8
    $region37: #{tpu_custom_call.1} parent=1 // pred_fallthru
      _
    // Predicated region
    $region38: #{tpu_custom_call.1} parent=1 // pred_check
      _
    $region39: #{tpu_custom_call.1} parent=1 // pred_check_branch
      %135 = sbr.rel (0) target = $region41
    $region40: #{tpu_custom_call.1} parent=1 // pred_region
      %136 = dma.done [#allocation4], 256
    $region41: #{tpu_custom_call.1} parent=1 // pred_fallthru
      _
    %137 = vsyncpa [#allocation3], 1
    %138 = vsyncpa [#allocation6], 1
    %139 = vsyncpa [#allocation9], 1
    %140 = vsyncpa [#allocation4], 1

</llo_original>
